<compile_context>
chip_gen: v7x
topology: tpu7x:2x2x1
jax: 0.10.0
libtpu: 0.0.40
codegen_flags: <defaults>
</compile_context>

<pallas_src>
import jax
import jax.numpy as jnp
from jax.experimental import pallas as pl
from jax.experimental.pallas import tpu as pltpu

IN_FEATURES = 4
OUT_FEATURES = 8


def _linear_add_kernel(x_ref, p_ref, o_ref):
    # x_ref : (4,)   f32 in SMEM  -- the input vector, read as scalars
    # p_ref : (5, 8) f32 in VMEM  -- rows 0..3 = W^T, row 4 = bias + a
    # o_ref : (1, 8) f32 in VMEM  -- output row
    acc = p_ref[IN_FEATURES : IN_FEATURES + 1, :]          # (1, 8) = bias + a
    # 4 unrolled scalar-broadcast FMAs on the VPU; no cross-lane work, no XLU.
    for k in range(IN_FEATURES):
        acc = acc + x_ref[k] * p_ref[k : k + 1, :]
    o_ref[...] = acc


def linear_plus_a(x1, packed_params):
    """Computes Linear(x1) + a == x1 @ W^T + bias + a.

    x1:            (4,)   float32
    packed_params: (5, 8) float32, rows 0..3 = W^T, row 4 = bias + a
                   (packing hoisted out of the per-call path -> single DMA)
    returns        (8,)   float32
    """
    out = pl.pallas_call(
        _linear_add_kernel,
        out_shape=jax.ShapeDtypeStruct((1, OUT_FEATURES), jnp.float32),
        in_specs=[
            pl.BlockSpec(memory_space=pltpu.MemorySpace.SMEM),   # x as scalars
            pl.BlockSpec(memory_space=pltpu.MemorySpace.VMEM),   # packed params
        ],
        out_specs=pl.BlockSpec(memory_space=pltpu.MemorySpace.VMEM),
    )(x1.astype(jnp.float32), packed_params)
    return out.reshape(OUT_FEATURES)


def pack_params(weight, bias, a):
    """One-time parameter prep (outside the hot path): stack W^T and bias+a."""
    w_t = weight.T.astype(jnp.float32)                          # (4, 8)
    ba = (bias + a).reshape(1, OUT_FEATURES).astype(jnp.float32)  # (1, 8)
    return jnp.concatenate([w_t, ba], axis=0)                   # (5, 8)


if __name__ == "__main__":
    key = jax.random.PRNGKey(0)
    k_w, k_b, k_a, k_x = jax.random.split(key, 4)

    # Deterministic parameter init (shapes from the PyTorch module).
    weight = jax.random.normal(k_w, (OUT_FEATURES, IN_FEATURES), jnp.float32) * 0.5
    bias = jax.random.normal(k_b, (OUT_FEATURES,), jnp.float32) * 0.1
    a = jax.random.normal(k_a, (OUT_FEATURES,), jnp.float32)
    x1 = jax.random.normal(k_x, (IN_FEATURES,), jnp.float32)

    # Hoisted, one-time packing (single VMEM operand for the kernel).
    packed = pack_params(weight, bias, a)

    fwd = jax.jit(linear_plus_a)
    out = fwd(x1, packed)
    out = jax.block_until_ready(out)

    # Reference check in plain JAX.
    ref = x1 @ weight.T + bias + a
    assert out.shape == (OUT_FEATURES,)
    assert jnp.allclose(out, ref, atol=1e-5, rtol=1e-5), (out, ref)

    print("KERNEL_OK")
</pallas_src>

<mosaic_0001>
module attributes {stable_mosaic.version = 11 : i64} {
  func.func @_linear_add_kernel(%arg0: memref<4xf32, #tpu.memory_space<smem>>, %arg1: memref<5x8xf32, #tpu.memory_space<vmem>>, %arg2: memref<1x8xf32, #tpu.memory_space<vmem>>) attributes {dimension_semantics = [], scalar_prefetch = 0 : i64, scratch_operands = 0 : i64, tpu.core_type = #tpu.core_type<tc>} {
    %c4 = arith.constant 4 : index
    %c0 = arith.constant 0 : index
    %0 = vector.load %arg1[%c4, %c0] : memref<5x8xf32, #tpu.memory_space<vmem>>, vector<1x8xf32>
    %c0_0 = arith.constant 0 : index
    %1 = memref.load %arg0[%c0_0] : memref<4xf32, #tpu.memory_space<smem>>
    %c0_1 = arith.constant 0 : index
    %c0_2 = arith.constant 0 : index
    %2 = vector.load %arg1[%c0_1, %c0_2] : memref<5x8xf32, #tpu.memory_space<vmem>>, vector<1x8xf32>
    %3 = vector.broadcast %1 : f32 to vector<1x8xf32>
    %4 = arith.mulf %3, %2 : vector<1x8xf32>
    %5 = arith.addf %0, %4 : vector<1x8xf32>
    %c1 = arith.constant 1 : index
    %6 = memref.load %arg0[%c1] : memref<4xf32, #tpu.memory_space<smem>>
    %c1_3 = arith.constant 1 : index
    %c0_4 = arith.constant 0 : index
    %7 = vector.load %arg1[%c1_3, %c0_4] : memref<5x8xf32, #tpu.memory_space<vmem>>, vector<1x8xf32>
    %8 = vector.broadcast %6 : f32 to vector<1x8xf32>
    %9 = arith.mulf %8, %7 : vector<1x8xf32>
    %10 = arith.addf %5, %9 : vector<1x8xf32>
    %c2 = arith.constant 2 : index
    %11 = memref.load %arg0[%c2] : memref<4xf32, #tpu.memory_space<smem>>
    %c2_5 = arith.constant 2 : index
    %c0_6 = arith.constant 0 : index
    %12 = vector.load %arg1[%c2_5, %c0_6] : memref<5x8xf32, #tpu.memory_space<vmem>>, vector<1x8xf32>
    %13 = vector.broadcast %11 : f32 to vector<1x8xf32>
    %14 = arith.mulf %13, %12 : vector<1x8xf32>
    %15 = arith.addf %10, %14 : vector<1x8xf32>
    %c3 = arith.constant 3 : index
    %16 = memref.load %arg0[%c3] : memref<4xf32, #tpu.memory_space<smem>>
    %c3_7 = arith.constant 3 : index
    %c0_8 = arith.constant 0 : index
    %17 = vector.load %arg1[%c3_7, %c0_8] : memref<5x8xf32, #tpu.memory_space<vmem>>, vector<1x8xf32>
    %18 = vector.broadcast %16 : f32 to vector<1x8xf32>
    %19 = arith.mulf %18, %17 : vector<1x8xf32>
    %20 = arith.addf %15, %19 : vector<1x8xf32>
    %c0_9 = arith.constant 0 : index
    %c0_10 = arith.constant 0 : index
    %21 = vector.load %arg2[%c0_9, %c0_10] : memref<1x8xf32, #tpu.memory_space<vmem>>, vector<1x8xf32>
    tpu.vector_store %arg2[%c0_9, %c0_10], %20 {strides = array<i32>} : memref<1x8xf32, #tpu.memory_space<vmem>>, vector<1x8xf32>,
    return
  }
}

</mosaic_0001>

<llo_original>
// kernel: linear_plus_a.1
$region0: #{linear_plus_a.1}
  #allocation0 [shape = 'u32[]', space=smem, size = 0x4, offset = 0x4, fixed_abs, tag = 'smem constant byte address 0x4 - core index']
  #allocation1 [shape = 'u32[144,128]{1,0:T(1,128)}', space=vmem, size = 0x12000, scoped, tag = 'internal scratch']
  %s0 = inlined_call_operand.hbm [shape: f32[4], index: 0, kind: input, shape index: {}]
  %s1 = inlined_call_operand.hbm [shape: f32[5,8], index: 1, kind: input, shape index: {}]
  %s2 = inlined_call_operand.hbm [shape: f32[1,8], index: 2, kind: output, shape index: {}]
  %s3 = sld [smem:[#allocation0]]
  $region26: #{linear_plus_a.1} parent=0
    _
  %s5 = ssub.s32 1, %s3
  %s6 = scalar_select 0, %s5, %s3
  $region1: #{linear_plus_a.1} parent=0
    #allocation2 [shape = 'u8[512]{0}', space=smem, size = 0x200, scoped, tag = 'input window, operand 0, single buffered']
    #allocation3 [shape = 's32[1]{0}', space=sflag, size = 0x4, scoped, tag = 'scoped memory for linear_plus_a.1']
    #allocation4 [shape = 's32[1]{0}', space=sflag, size = 0x4, scoped, tag = 'scoped memory for linear_plus_a.1']
    #allocation5 [shape = 's32[1]{0}', space=sflag, size = 0x4, scoped, tag = 'scoped memory for linear_plus_a.1']
    #allocation6 [shape = 'u8[4096]{0}', space=vmem, size = 0x1000, scoped, tag = 'input window, operand 1, single buffered']
    #allocation7 [shape = 'u8[512]{0}', space=vmem, size = 0x400, scoped, tag = 'output window, operand 0, single buffered']
    %7 = vsyncpa [#allocation5], 0
    %8 = vsyncpa [#allocation3], 0
    %9 = vsyncpa [#allocation4], 0
    // Predicated region
    $region2: #{linear_plus_a.1} parent=1 // pred_check
      _
    $region3: #{linear_plus_a.1} parent=1 // pred_check_branch
      %11 = sbr.rel (0) target = $region5
    $region4: #{linear_plus_a.1} parent=1 // pred_region
      %s13 = ssub.s32 16, 16
      %14 = vsyncadd [#allocation5], %s13
      %17 = dma.hbm_to_smem %s0, 16, [#allocation2], [#allocation5]
    $region5: #{linear_plus_a.1} parent=1 // pred_fallthru
      _
    // Predicated region
    $region6: #{linear_plus_a.1} parent=1 // pred_check
      _
    $region7: #{linear_plus_a.1} parent=1 // pred_check_branch
      %19 = sbr.rel (0) target = $region9
    $region8: #{linear_plus_a.1} parent=1 // pred_region
      %s21 = ssub.s32 128, 128
      %22 = vsyncadd [#allocation3], %s21
      %s24 = sshll.u32 [#allocation6], 4
      %s25 = int_to_ptr.vmem [resolvable:$true] %s24
      %27 = dma.hbm_to_vmem [thread:$0]  %s1, 128, %s25, [#allocation3]
    $region9: #{linear_plus_a.1} parent=1 // pred_fallthru
      _
    // Predicated region
    $region10: #{linear_plus_a.1} parent=1 // pred_check
      _
    $region11: #{linear_plus_a.1} parent=1 // pred_check_branch
      %29 = sbr.rel (0) target = $region13
    $region12: #{linear_plus_a.1} parent=1 // pred_region
      %30 = dma.done [#allocation5], 16
    $region13: #{linear_plus_a.1} parent=1 // pred_fallthru
      _
    // Predicated region
    $region14: #{linear_plus_a.1} parent=1 // pred_check
      _
    $region15: #{linear_plus_a.1} parent=1 // pred_check_branch
      %32 = sbr.rel (0) target = $region17
    $region16: #{linear_plus_a.1} parent=1 // pred_region
      %33 = dma.done [#allocation3], 128
    $region17: #{linear_plus_a.1} parent=1 // pred_fallthru
      _
    %34 = sfence
    %v35 = vld [vmem:[#allocation6 + $0x4] sm:$0x1]
    %s36 = sld [smem:[#allocation2]]
    %v37 = vld [vmem:[#allocation6] sm:$0x1]
    %v38 = vstv %s36
    %v39 = vmul.f32 %v38, %v37
    %v40 = vadd.f32 %v35, %v39
    %s41 = sld [smem:[#allocation2 + $0x1]]
    %v42 = vld [vmem:[#allocation6 + $0x1] sm:$0x1]
    %v43 = vstv %s41
    %v44 = vmul.f32 %v43, %v42
    %v45 = vadd.f32 %v40, %v44
    %s46 = sld [smem:[#allocation2 + $0x2]]
    %v47 = vld [vmem:[#allocation6 + $0x2] sm:$0x1]
    %v48 = vstv %s46
    %v49 = vmul.f32 %v48, %v47
    %v50 = vadd.f32 %v45, %v49
    %s51 = sld [smem:[#allocation2 + $0x3]]
    %v52 = vld [vmem:[#allocation6 + $0x3] sm:$0x1]
    %v53 = vstv %s51
    %v54 = vmul.f32 %v53, %v52
    %v55 = vadd.f32 %v50, %v54
    %vm56 = vcmask 57344
    %57 = vst.msk [vmem:[#allocation7] sm:$0x1] %vm56, %v55
    // Predicated region
    $region18: #{linear_plus_a.1} parent=1 // pred_check
      _
    $region19: #{linear_plus_a.1} parent=1 // pred_check_branch
      %59 = sbr.rel (0) target = $region21
    $region20: #{linear_plus_a.1} parent=1 // pred_region
      %s61 = ssub.s32 16, 16
      %62 = vsyncadd [#allocation4], %s61
      %s64 = sshll.u32 [#allocation7], 4
      %s65 = int_to_ptr.vmem [resolvable:$true] %s64
      %67 = dma.vmem_to_hbm [thread:$0]  %s65, 16, %s2, [#allocation4]
    $region21: #{linear_plus_a.1} parent=1 // pred_fallthru
      _
    // Predicated region
    $region22: #{linear_plus_a.1} parent=1 // pred_check
      _
    $region23: #{linear_plus_a.1} parent=1 // pred_check_branch
      %69 = sbr.rel (0) target = $region25
    $region24: #{linear_plus_a.1} parent=1 // pred_region
      %70 = dma.done [#allocation4], 16
    $region25: #{linear_plus_a.1} parent=1 // pred_fallthru
      _
    %71 = vsyncpa [#allocation3], 1
    %72 = vsyncpa [#allocation4], 1
    %73 = vsyncpa [#allocation5], 1

</llo_original>
